<compile_context>
chip_gen: v7x
topology: tpu7x:2x2x1
jax: 0.10.0
libtpu: 0.0.40
codegen_flags: <defaults>
</compile_context>

<pallas_src>
import functools

import jax
import jax.numpy as jnp
from jax import lax
from jax.experimental import pallas as pl
from jax.experimental.pallas import tpu as pltpu

EPS = 1e-6


# ----------------------------------------------------------------------------
# Hardware-aware budgets & helpers
# ----------------------------------------------------------------------------
@functools.lru_cache(maxsize=None)
def _vmem_capacity_bytes():
    try:
        info = pltpu.get_tpu_info()
        for name in ("vmem_capacity_bytes", "vmem_bytes", "vmem_size_bytes"):
            v = getattr(info, name, None)
            if v:
                return int(v)
    except Exception:
        pass
    return 64 * 1024 * 1024          # conservative default (v7x per-TC VMEM)


def _is_big_vmem():
    # v5e / v6e: 128 MiB per TensorCore; v7x: 64 MiB.
    return _vmem_capacity_bytes() >= 100 * 1024 * 1024


def _vmem_limit_bytes():
    return (64 if _is_big_vmem() else 48) * 1024 * 1024


def _const_spec(shape, index_map):
    """BlockSpec for a constant-index operand: single-buffer it (it is fetched
    exactly once, double-buffering only wastes VMEM)."""
    try:
        return pl.BlockSpec(shape, index_map, pipeline_mode=pl.Buffered(1))
    except Exception:
        return pl.BlockSpec(shape, index_map)


# ----------------------------------------------------------------------------
# Kernel 1: fused per-pixel Linear + LayerNorm, channels-first (NCHW) layout.
#   y[b, cout, p] = LN_over_cout( sum_cin W[cout, cin] * x[b, cin, p] + bias )
# ----------------------------------------------------------------------------
def _linear_ln_kernel(x_ref, w_ref, b_ref, g_ref, beta_ref, o_ref):
    # x_ref: (1, Cin, tP)  pixels on the lane dim (lane-dense)
    # w_ref: (Cout, Cin)   PyTorch Linear weight, used as-is
    # b/g/beta: (Cout, 1)  f32 bias / LN gamma / LN beta
    # o_ref: (1, Cout, tP)
    x = x_ref[0].astype(w_ref.dtype)                                   # MXU dtype
    y = jnp.dot(w_ref[...], x, preferred_element_type=jnp.float32)     # (Cout, tP)
    y = y + b_ref[...]
    mu = jnp.mean(y, axis=0, keepdims=True)                            # LN over channels
    var = jnp.mean((y - mu) ** 2, axis=0, keepdims=True)
    yn = (y - mu) * lax.rsqrt(var + EPS)
    o_ref[0] = (yn * g_ref[...] + beta_ref[...]).astype(o_ref.dtype)


def linear_layernorm_cf(x3, w, b, g, beta, out_dtype):
    """x3: (B, Cin, P) channels-first pixels -> (B, Cout, P)."""
    B, Cin, P = x3.shape
    Cout = w.shape[0]
    big = _is_big_vmem()

    # Pixel tile: budget covers double-buffered in/out blocks + f32 temps.
    in_b = x3.dtype.itemsize
    out_b = jnp.dtype(out_dtype).itemsize
    per_px = 2 * Cin * in_b + 2 * Cout * out_b + 3 * Cout * 4
    budget = (12 if big else 5) * 1024 * 1024
    cap = 8192 if big else 2048
    tp = max(128, min(cap, (budget // max(1, per_px)) // 128 * 128))
    tp = min(tp, -(-P // 128) * 128)               # never larger than needed
    if B == 1 and P > 128:
        # v7x megacore: keep >= 2 steps on a parallel grid axis.
        tp = min(tp, (-(-P // 2) + 127) // 128 * 128)

    P_pad = -(-P // tp) * tp                       # pad instead of full-axis fallback
    if P_pad != P:
        x3 = jnp.pad(x3, ((0, 0), (0, 0), (0, P_pad - P)))

    out = pl.pallas_call(
        _linear_ln_kernel,
        out_shape=jax.ShapeDtypeStruct((B, Cout, P_pad), out_dtype),
        grid_spec=pltpu.PrefetchScalarGridSpec(
            num_scalar_prefetch=0,
            grid=(B, P_pad // tp),
            in_specs=[
                pl.BlockSpec((1, Cin, tp), lambda bi, pi: (bi, 0, pi)),
                _const_spec((Cout, Cin), lambda bi, pi: (0, 0)),
                _const_spec((Cout, 1), lambda bi, pi: (0, 0)),
                _const_spec((Cout, 1), lambda bi, pi: (0, 0)),
                _const_spec((Cout, 1), lambda bi, pi: (0, 0)),
            ],
            out_specs=pl.BlockSpec((1, Cout, tp), lambda bi, pi: (bi, 0, pi)),
        ),
        compiler_params=pltpu.CompilerParams(
            dimension_semantics=("parallel", "parallel"),
            vmem_limit_bytes=_vmem_limit_bytes()),
    )(x3, w, b, g, beta)
    return out[:, :, :P] if P_pad != P else out


# ----------------------------------------------------------------------------
# Kernel 2: separable bilinear upsample (align_corners=False), channel-tiled.
#   out[c] = Ah @ y[c] @ Aw^T, both MXU contractions over the LAST data dim.
# ----------------------------------------------------------------------------
def _bilinear_kernel(y_ref, aht_ref, awt_ref, o_ref, *, fold_out):
    # y_ref: (1, tc, H, W) native dtype; aht_ref: (H, Hout)=Ah^T; awt_ref: (W, Wout)=Aw^T
    cdt = aht_ref.dtype
    y = y_ref[0]                                              # no f32 round-trip
    tc, H, W = y.shape
    Hout = aht_ref.shape[1]
    Wout = awt_ref.shape[1]
    # 1) contract H: put H on the lane dim of the (small) input tile.
    yt = jnp.swapaxes(y, 1, 2).reshape(tc * W, H).astype(cdt)            # (tc*W, H)
    t = jnp.dot(yt, aht_ref[...], preferred_element_type=jnp.float32)    # (tc*W, Hout)
    # 2) contract W: again over the last dim; result lands in (ho, wo) order.
    t = jnp.swapaxes(t.reshape(tc, W, Hout), 1, 2).reshape(tc * Hout, W).astype(cdt)
    o = jnp.dot(t, awt_ref[...], preferred_element_type=jnp.float32)     # (tc*Hout, Wout)
    if fold_out:
        o_ref[0] = o.reshape(tc, Hout * Wout).astype(o_ref.dtype)        # lane-dense store
    else:
        o_ref[0] = o.reshape(tc, Hout, Wout).astype(o_ref.dtype)


def bilinear_upsample_cf(y4, aht, awt, out_dtype):
    """y4: (B, C, H, W) -> (B, C, Hout, Wout), NCHW."""
    B, C, H, W = y4.shape
    Hout, Wout = aht.shape[1], awt.shape[1]
    big = _is_big_vmem()

    yb = y4.dtype.itemsize
    cb = aht.dtype.itemsize
    ob = jnp.dtype(out_dtype).itemsize
    # Per-channel VMEM: double-buffered in/out blocks + in-kernel intermediates
    # (transposed copies, two f32 matmul results, output cast).
    per_c = (2 * H * W * yb + 2 * Hout * Wout * ob
             + H * W * cb + W * Hout * 4 + Hout * W * (cb + 4)
             + Hout * Wout * (4 + ob))
    budget = (24 if big else 12) * 1024 * 1024
    tc = max(1, min(C, budget // max(1, per_c)))
    if B == 1 and C >= 2:
        tc = min(tc, (C + 1) // 2)            # v7x megacore: >= 2 channel steps

    fold_out = Wout < 128                     # lane-dense store for narrow Wout
    if fold_out and tc < C:
        tc = max(8, (tc // 8) * 8)            # sublane-aligned block for folded store
        if tc >= C:
            tc = C

    C_pad = -(-C // tc) * tc                  # pad instead of divisor fallback
    if C_pad != C:
        y4 = jnp.pad(y4, ((0, 0), (0, C_pad - C), (0, 0), (0, 0)))

    kern = functools.partial(_bilinear_kernel, fold_out=fold_out)
    if fold_out:
        out_shape = jax.ShapeDtypeStruct((B, C_pad, Hout * Wout), out_dtype)
        out_spec = pl.BlockSpec((1, tc, Hout * Wout), lambda bi, ci: (bi, ci, 0))
    else:
        out_shape = jax.ShapeDtypeStruct((B, C_pad, Hout, Wout), out_dtype)
        out_spec = pl.BlockSpec((1, tc, Hout, Wout), lambda bi, ci: (bi, ci, 0, 0))

    out = pl.pallas_call(
        kern,
        out_shape=out_shape,
        grid_spec=pltpu.PrefetchScalarGridSpec(
            num_scalar_prefetch=0,
            grid=(B, C_pad // tc),
            in_specs=[
                pl.BlockSpec((1, tc, H, W), lambda bi, ci: (bi, ci, 0, 0)),
                _const_spec((H, Hout), lambda bi, ci: (0, 0)),
                _const_spec((W, Wout), lambda bi, ci: (0, 0)),
            ],
            out_specs=out_spec,
        ),
        compiler_params=pltpu.CompilerParams(
            dimension_semantics=("parallel", "parallel"),
            vmem_limit_bytes=_vmem_limit_bytes()),
    )(y4, aht, awt)

    if fold_out:
        out = out.reshape(B, C_pad, Hout, Wout)   # free (row-major) reshape
    if C_pad != C:
        out = out[:, :C]
    return out


# ----------------------------------------------------------------------------
# Glue: interpolation matrices + full forward
# ----------------------------------------------------------------------------
def bilinear_matrix(n_in, n_out):
    """(n_out, n_in) row-stochastic matrix matching PyTorch bilinear upsampling,
    align_corners=False (nn.Upsample default)."""
    scale = n_in / n_out
    dst = jnp.arange(n_out, dtype=jnp.float32)
    src = (dst + 0.5) * scale - 0.5
    src = jnp.maximum(src, 0.0)                          # PyTorch clamps negatives
    i0 = jnp.clip(jnp.floor(src).astype(jnp.int32), 0, n_in - 1)
    i1 = jnp.clip(i0 + 1, 0, n_in - 1)
    lam = src - i0.astype(jnp.float32)
    m = jnp.zeros((n_out, n_in), jnp.float32)
    rows = jnp.arange(n_out)
    m = m.at[rows, i0].add(1.0 - lam)
    m = m.at[rows, i1].add(lam)
    return m


def upsample_convnext_forward(x, params, ratio, *, compute_dtype=jnp.bfloat16,
                              out_dtype=None):
    """x: (B, Cin, H, W) NCHW -> (B, Cout, H*2**ratio, W*2**ratio) NCHW.

    compute_dtype: MXU operand dtype (bf16 recommended); accumulation and all
    LayerNorm math stay in f32.  Use jnp.float32 for bit-faithful fp32 semantics.
    out_dtype: final output dtype (defaults to x.dtype); bf16 halves the dominant
    HBM output stream if the consumer tolerates it.
    """
    B, Cin, H, W = x.shape
    Cout = params["lin_w"].shape[0]
    s = 2 ** ratio
    Hout, Wout = H * s, W * s
    out_dtype = x.dtype if out_dtype is None else out_dtype

    w = params["lin_w"].astype(compute_dtype)                  # (Cout, Cin)
    b = params["lin_b"].astype(jnp.float32).reshape(Cout, 1)
    g = params["ln_w"].astype(jnp.float32).reshape(Cout, 1)
    beta = params["ln_b"].astype(jnp.float32).reshape(Cout, 1)

    # Fused Linear + LayerNorm directly on the NCHW layout (no HBM transposes).
    x3 = x.reshape(B, Cin, H * W)
    y3 = linear_layernorm_cf(x3, w, b, g, beta, out_dtype=compute_dtype)
    y4 = y3.reshape(B, Cout, H, W)                             # free reshape

    # Separable bilinear interpolation matrices (contraction dims first).
    aht = bilinear_matrix(H, Hout).T.astype(compute_dtype)     # (H, Hout)
    awt = bilinear_matrix(W, Wout).T.astype(compute_dtype)     # (W, Wout)
    return bilinear_upsample_cf(y4, aht, awt, out_dtype=out_dtype)


def reference_forward(x, params, ratio):
    """Pure-JAX fp32 reference with PyTorch-identical semantics."""
    B, Cin, H, W = x.shape
    wT = params["lin_w"].T                                     # (Cin, Cout)
    xl = jnp.transpose(x, (0, 2, 3, 1))
    y = xl @ wT + params["lin_b"]
    mu = y.mean(-1, keepdims=True)
    var = ((y - mu) ** 2).mean(-1, keepdims=True)
    y = (y - mu) / jnp.sqrt(var + EPS) * params["ln_w"] + params["ln_b"]
    y = jnp.transpose(y, (0, 3, 1, 2))
    s = 2 ** ratio
    ah = bilinear_matrix(H, H * s)
    aw = bilinear_matrix(W, W * s)
    out = jnp.einsum("oh,bchw->bcow", ah, y)
    out = jnp.einsum("bcow,pw->bcop", out, aw)
    return out


if __name__ == "__main__":
    key = jax.random.PRNGKey(0)
    k_x, k_w, k_b = jax.random.split(key, 3)

    B, Cin, Cout, H, W = 2, 4, 8, 16, 16
    ratio = 1

    x = jax.random.normal(k_x, (B, Cin, H, W), dtype=jnp.float32)
    params = {
        # nn.Linear(inchannel, outchannel): weight (Cout, Cin), bias (Cout)
        "lin_w": 0.1 * jax.random.normal(k_w, (Cout, Cin), dtype=jnp.float32),
        "lin_b": 0.1 * jax.random.normal(k_b, (Cout,), dtype=jnp.float32),
        # LayerNorm(outchannel): weight ones, bias zeros
        "ln_w": jnp.ones((Cout,), dtype=jnp.float32),
        "ln_b": jnp.zeros((Cout,), dtype=jnp.float32),
    }

    ref = jax.block_until_ready(reference_forward(x, params, ratio))
    out_shape = (B, Cout, H * 2 ** ratio, W * 2 ** ratio)

    # 1) exact-semantics path (fp32 operands) -> tight tolerance vs reference
    out_f32 = jax.block_until_ready(
        upsample_convnext_forward(x, params, ratio, compute_dtype=jnp.float32))
    assert out_f32.shape == out_shape
    assert jnp.allclose(out_f32, ref, atol=1e-4, rtol=1e-4), "fp32 mismatch vs reference"

    # 2) performance path (bf16 MXU operands / bf16 HBM intermediate, f32 LN math)
    out_bf16 = jax.block_until_ready(
        upsample_convnext_forward(x, params, ratio, compute_dtype=jnp.bfloat16))
    assert out_bf16.shape == out_shape
    assert jnp.allclose(out_bf16, ref, atol=5e-2, rtol=5e-2), "bf16 mismatch vs reference"

    print("KERNEL_OK")
</pallas_src>

<mosaic_0001>
module attributes {stable_mosaic.version = 11 : i64} {
  func.func @_linear_ln_kernel(%arg0: i32, %arg1: i32, %arg2: memref<1x4x256xf32, #tpu.memory_space<vmem>>, %arg3: memref<8x4xf32, #tpu.memory_space<vmem>>, %arg4: memref<8x1xf32, #tpu.memory_space<vmem>>, %arg5: memref<8x1xf32, #tpu.memory_space<vmem>>, %arg6: memref<8x1xf32, #tpu.memory_space<vmem>>, %arg7: memref<1x8x256xf32, #tpu.memory_space<vmem>>) attributes {dimension_semantics = [#tpu.dimension_semantics<parallel>, #tpu.dimension_semantics<parallel>], iteration_bounds = array<i64: 2, 1>, scalar_prefetch = 0 : i64, scratch_operands = 0 : i64, tpu.core_type = #tpu.core_type<tc>, window_params = [{transform_indices = @transform_0, window_bounds = array<i64: 1, 4, 256>}, {pipeline_mode = #tpu.pipeline_mode<synchronous>, transform_indices = @transform_1, window_bounds = array<i64: 8, 4>}, {pipeline_mode = #tpu.pipeline_mode<synchronous>, transform_indices = @transform_2, window_bounds = array<i64: 8, 1>}, {pipeline_mode = #tpu.pipeline_mode<synchronous>, transform_indices = @transform_3, window_bounds = array<i64: 8, 1>}, {pipeline_mode = #tpu.pipeline_mode<synchronous>, transform_indices = @transform_4, window_bounds = array<i64: 8, 1>}, {transform_indices = @transform_5, window_bounds = array<i64: 1, 8, 256>}]} {
    %c0 = arith.constant 0 : index
    %c0_0 = arith.constant 0 : index
    %c0_1 = arith.constant 0 : index
    %0 = vector.load %arg2[%c0, %c0_0, %c0_1] : memref<1x4x256xf32, #tpu.memory_space<vmem>>, vector<1x4x256xf32>
    %1 = vector.shape_cast %0 : vector<1x4x256xf32> to vector<4x256xf32>
    %c0_2 = arith.constant 0 : index
    %c0_3 = arith.constant 0 : index
    %2 = vector.load %arg3[%c0_2, %c0_3] : memref<8x4xf32, #tpu.memory_space<vmem>>, vector<8x4xf32>
    %cst = arith.constant dense<0.000000e+00> : vector<8x256xf32>
    %3 = tpu.matmul %2, %1, %cst {dimension_numbers = #tpu.dot_dimension_numbers<[1], [0], [0], [1], [0, 0, 1, 1], [], []>} : vector<8x4xf32>, vector<4x256xf32>, vector<8x256xf32> -> vector<8x256xf32>
    %c0_4 = arith.constant 0 : index
    %c0_5 = arith.constant 0 : index
    %4 = vector.load %arg4[%c0_4, %c0_5] : memref<8x1xf32, #tpu.memory_space<vmem>>, vector<8x1xf32>
    %5 = vector.broadcast %4 : vector<8x1xf32> to vector<8x256xf32>
    %6 = arith.addf %3, %5 : vector<8x256xf32>
    %cst_6 = arith.constant dense<0.000000e+00> : vector<256xf32>
    %7 = vector.multi_reduction <add>, %6, %cst_6 [0] : vector<8x256xf32> to vector<256xf32>
    %8 = vector.shape_cast %7 : vector<256xf32> to vector<1x256xf32>
    %cst_7 = arith.constant 8.000000e+00 : f32
    %9 = vector.broadcast %cst_7 : f32 to vector<1x256xf32>
    %10 = arith.divf %8, %9 : vector<1x256xf32>
    %11 = vector.broadcast %10 : vector<1x256xf32> to vector<8x256xf32>
    %12 = arith.subf %6, %11 : vector<8x256xf32>
    %13 = arith.mulf %12, %12 : vector<8x256xf32>
    %cst_8 = arith.constant dense<0.000000e+00> : vector<256xf32>
    %14 = vector.multi_reduction <add>, %13, %cst_8 [0] : vector<8x256xf32> to vector<256xf32>
    %15 = vector.shape_cast %14 : vector<256xf32> to vector<1x256xf32>
    %cst_9 = arith.constant 8.000000e+00 : f32
    %16 = vector.broadcast %cst_9 : f32 to vector<1x256xf32>
    %17 = arith.divf %15, %16 : vector<1x256xf32>
    %18 = vector.broadcast %10 : vector<1x256xf32> to vector<8x256xf32>
    %19 = arith.subf %6, %18 : vector<8x256xf32>
    %cst_10 = arith.constant 9.99999997E-7 : f32
    %20 = vector.broadcast %cst_10 : f32 to vector<1x256xf32>
    %21 = arith.addf %17, %20 : vector<1x256xf32>
    %22 = math.rsqrt %21 : vector<1x256xf32>
    %23 = vector.broadcast %22 : vector<1x256xf32> to vector<8x256xf32>
    %24 = arith.mulf %19, %23 : vector<8x256xf32>
    %c0_11 = arith.constant 0 : index
    %c0_12 = arith.constant 0 : index
    %25 = vector.load %arg5[%c0_11, %c0_12] : memref<8x1xf32, #tpu.memory_space<vmem>>, vector<8x1xf32>
    %26 = vector.broadcast %25 : vector<8x1xf32> to vector<8x256xf32>
    %27 = arith.mulf %24, %26 : vector<8x256xf32>
    %c0_13 = arith.constant 0 : index
    %c0_14 = arith.constant 0 : index
    %28 = vector.load %arg6[%c0_13, %c0_14] : memref<8x1xf32, #tpu.memory_space<vmem>>, vector<8x1xf32>
    %29 = vector.broadcast %28 : vector<8x1xf32> to vector<8x256xf32>
    %30 = arith.addf %27, %29 : vector<8x256xf32>
    %c0_15 = arith.constant 0 : index
    %c0_16 = arith.constant 0 : index
    %c0_17 = arith.constant 0 : index
    %31 = vector.load %arg7[%c0_15, %c0_16, %c0_17] : memref<1x8x256xf32, #tpu.memory_space<vmem>>, vector<1x8x256xf32>
    %32 = vector.shape_cast %31 : vector<1x8x256xf32> to vector<8x256xf32>
    %33 = vector.shape_cast %30 : vector<8x256xf32> to vector<1x8x256xf32>
    tpu.vector_store %arg7[%c0_15, %c0_16, %c0_17], %33 {strides = array<i32>} : memref<1x8x256xf32, #tpu.memory_space<vmem>>, vector<1x8x256xf32>,
    return
  }
  func.func @transform_0(%arg0: i32, %arg1: i32) -> (i32, i32, i32) {
    %c0_i32 = arith.constant 0 : i32
    %c0_i32_0 = arith.constant 0 : i32
    return %arg0, %c0_i32, %arg1 : i32, i32, i32
  }
  func.func @transform_1(%arg0: i32, %arg1: i32) -> (i32, i32) {
    %c0_i32 = arith.constant 0 : i32
    %c0_i32_0 = arith.constant 0 : i32
    %c0_i32_1 = arith.constant 0 : i32
    return %c0_i32, %c0_i32_0 : i32, i32
  }
  func.func @transform_2(%arg0: i32, %arg1: i32) -> (i32, i32) {
    %c0_i32 = arith.constant 0 : i32
    %c0_i32_0 = arith.constant 0 : i32
    %c0_i32_1 = arith.constant 0 : i32
    return %c0_i32, %c0_i32_0 : i32, i32
  }
  func.func @transform_3(%arg0: i32, %arg1: i32) -> (i32, i32) {
    %c0_i32 = arith.constant 0 : i32
    %c0_i32_0 = arith.constant 0 : i32
    %c0_i32_1 = arith.constant 0 : i32
    return %c0_i32, %c0_i32_0 : i32, i32
  }
  func.func @transform_4(%arg0: i32, %arg1: i32) -> (i32, i32) {
    %c0_i32 = arith.constant 0 : i32
    %c0_i32_0 = arith.constant 0 : i32
    %c0_i32_1 = arith.constant 0 : i32
    return %c0_i32, %c0_i32_0 : i32, i32
  }
  func.func @transform_5(%arg0: i32, %arg1: i32) -> (i32, i32, i32) {
    %c0_i32 = arith.constant 0 : i32
    %c0_i32_0 = arith.constant 0 : i32
    return %arg0, %c0_i32, %arg1 : i32, i32, i32
  }
}

</mosaic_0001>

<llo_original>
// kernel: tpu_custom_call.1
$region0: #{tpu_custom_call.1}
  #allocation0 [shape = 'u32[]', space=smem, size = 0x4, offset = 0x4, fixed_abs, tag = 'smem constant byte address 0x4 - core index']
  #allocation1 [shape = 'u32[144,128]{1,0:T(1,128)}', space=vmem, size = 0x12000, scoped, tag = 'internal scratch']
  %s0 = inlined_call_operand.vmem [shape: f32[2,4,256], index: 0, kind: input, shape index: {}]
  %s1 = inlined_call_operand.vmem [shape: f32[8,4], index: 1, kind: input, shape index: {}]
  %s2 = inlined_call_operand.vmem [shape: f32[8,1], index: 2, kind: input, shape index: {}]
  %s3 = inlined_call_operand.vmem [shape: f32[8,1], index: 3, kind: input, shape index: {}]
  %s4 = inlined_call_operand.vmem [shape: f32[8,1], index: 4, kind: input, shape index: {}]
  %s5 = inlined_call_operand.hbm [shape: f32[2,8,256], index: 5, kind: output, shape index: {}]
  %s6 = sld [smem:[#allocation0]]
  $region53: #{tpu_custom_call.1} parent=0
    _
  %s8 = ssub.s32 1, %s6
  %s9 = scalar_select 0, %s8, %s6
  $region1: #{tpu_custom_call.1} parent=0
    #allocation2 [shape = 'u8[16384]{0}', space=vmem, size = 0x4000, scoped, tag = 'output window, operand 0']
    #allocation3 [shape = 's32[2]{0}', space=sflag, size = 0x8, scoped, tag = 'scoped memory for tpu_custom_call.1']
    %10 = vsyncpa [#allocation3], 0
    %s11 = scalar_lea.sflag [#allocation3], 1
    %12 = vsyncpa %s11, 0
    loop: start=0, step=1, limit=4
    $region2: #{tpu_custom_call.1} parent=1 // loop_pre_header
      _
    $region3: #{tpu_custom_call.1} parent=1 // loop_header
      %s14 = sphi 0, %s18
      %p15 = scmp.ge.s32.totalorder %s14, 4
      %s21 = sphi 0, %s33
      %s22 = sphi 0, %s29
      %s23 = sphi 0, %s21
      %s24 = sphi 0, %s22
      %s25 = sphi 0, %s23
      %s26 = sphi 0, %s24
      %s38 = sphi 0, %s40
      %s41 = sphi 0, %s38
      %s42 = sphi 0, %s41
      %s58 = sphi 0, %s42
      %s62 = sphi 0, %s62
      %s64 = sphi 0, %s62
      %s65 = sphi 0, %s64
      %s79 = sphi 0, %s65
      %s83 = sphi 0, %s83
      %s85 = sphi 0, %s83
      %s86 = sphi 0, %s85
      %s100 = sphi 0, %s86
      %s104 = sphi 0, %s104
      %s106 = sphi 0, %s104
      %s107 = sphi 0, %s106
      %s121 = sphi 0, %s107
      %s125 = sphi 0, %s125
      %s127 = sphi 0, %s125
      %s128 = sphi 0, %s127
      %s142 = sphi 0, %s128
      %s150 = sphi 0, %s152
      %s153 = sphi 0, %s150
      %s154 = sphi 0, %s153
      %s170 = sphi 0, %s154
    $region4: #{tpu_custom_call.1} parent=1 // loop_header_branch
      %17 = sbr.rel (%p15) target = $region8
    $region5: #{tpu_custom_call.1} parent=1 // loop_body
      %s19 = ssub.s32 %s14, 1
      %s20 = ssub.s32 %s14, 2
      %s27 = sadd.s32 1, %s22
      %p28 = scmp.ge.s32.totalorder %s27, 1
      %s29 = scalar_select %p28, 0, %s27
      %s30 = sadd.s32 1, %s21
      %s31 = scalar_select %p28, %s30, %s21
      %p32 = scmp.ge.s32.totalorder %s31, 2
      %s33 = scalar_select %p32, 0, %s31
      %s34 = ssub.s32 %s21, %s33
      %s35 = ssub.s32 %s22, %s29
      %s36 = sor.u32 %s34, %s35
      %p37 = scmp.eq.s32.totalorder %s36, 0
      %s39 = sadd.s32 %s38, 1
      %s40 = scalar_select %p37, %s38, %s39
      %p43 = pneg %p37
      %p44 = scmp.eq.s32.totalorder %s14, 1
      %p45 = por %p43, %p44
      %p46 = scmp.ne.s32.totalorder %s38, %s41
      %p47 = scmp.eq.s32.totalorder %s14, 0
      %p48 = por %p46, %p47
      %p49 = scmp.ne.s32.totalorder %s38, %s41
      %p50 = scmp.eq.s32.totalorder %s19, 1
      %p51 = por %p49, %p50
      %p52 = scmp.ne.s32.totalorder %s41, %s42
      %p53 = scmp.eq.s32.totalorder %s19, 0
      %p54 = por %p52, %p53
      %p55 = scmp.ne.s32.totalorder %s41, %s42
      %p56 = scmp.eq.s32.totalorder %s20, 1
      %p57 = por %p55, %p56
      %p59 = scmp.ne.s32.totalorder %s42, %s58
      %p60 = scmp.eq.s32.totalorder %s20, 0
      %p61 = por %p59, %p60
      %s63 = sadd.s32 %s62, 1
      %p66 = scmp.eq.s32.totalorder %s14, 1
      %p67 = scmp.ne.s32.totalorder %s62, %s64
      %p68 = scmp.eq.s32.totalorder %s14, 0
      %p69 = por %p67, %p68
      %p70 = scmp.ne.s32.totalorder %s62, %s64
      %p71 = scmp.eq.s32.totalorder %s19, 1
      %p72 = por %p70, %p71
      %p73 = scmp.ne.s32.totalorder %s64, %s65
      %p74 = scmp.eq.s32.totalorder %s19, 0
      %p75 = por %p73, %p74
      %p76 = scmp.ne.s32.totalorder %s64, %s65
      %p77 = scmp.eq.s32.totalorder %s20, 1
      %p78 = por %p76, %p77
      %p80 = scmp.ne.s32.totalorder %s65, %s79
      %p81 = scmp.eq.s32.totalorder %s20, 0
      %p82 = por %p80, %p81
      %s84 = sadd.s32 %s83, 1
      %p87 = scmp.eq.s32.totalorder %s14, 1
      %p88 = scmp.ne.s32.totalorder %s83, %s85
      %p89 = scmp.eq.s32.totalorder %s14, 0
      %p90 = por %p88, %p89
      %p91 = scmp.ne.s32.totalorder %s83, %s85
      %p92 = scmp.eq.s32.totalorder %s19, 1
      %p93 = por %p91, %p92
      %p94 = scmp.ne.s32.totalorder %s85, %s86
      %p95 = scmp.eq.s32.totalorder %s19, 0
      %p96 = por %p94, %p95
      %p97 = scmp.ne.s32.totalorder %s85, %s86
      %p98 = scmp.eq.s32.totalorder %s20, 1
      %p99 = por %p97, %p98
      %p101 = scmp.ne.s32.totalorder %s86, %s100
      %p102 = scmp.eq.s32.totalorder %s20, 0
      %p103 = por %p101, %p102
      %s105 = sadd.s32 %s104, 1
      %p108 = scmp.eq.s32.totalorder %s14, 1
      %p109 = scmp.ne.s32.totalorder %s104, %s106
      %p110 = scmp.eq.s32.totalorder %s14, 0
      %p111 = por %p109, %p110
      %p112 = scmp.ne.s32.totalorder %s104, %s106
      %p113 = scmp.eq.s32.totalorder %s19, 1
      %p114 = por %p112, %p113
      %p115 = scmp.ne.s32.totalorder %s106, %s107
      %p116 = scmp.eq.s32.totalorder %s19, 0
      %p117 = por %p115, %p116
      %p118 = scmp.ne.s32.totalorder %s106, %s107
      %p119 = scmp.eq.s32.totalorder %s20, 1
      %p120 = por %p118, %p119
      %p122 = scmp.ne.s32.totalorder %s107, %s121
      %p123 = scmp.eq.s32.totalorder %s20, 0
      %p124 = por %p122, %p123
      %s126 = sadd.s32 %s125, 1
      %p129 = scmp.eq.s32.totalorder %s14, 1
      %p130 = scmp.ne.s32.totalorder %s125, %s127
      %p131 = scmp.eq.s32.totalorder %s14, 0
      %p132 = por %p130, %p131
      %p133 = scmp.ne.s32.totalorder %s125, %s127
      %p134 = scmp.eq.s32.totalorder %s19, 1
      %p135 = por %p133, %p134
      %p136 = scmp.ne.s32.totalorder %s127, %s128
      %p137 = scmp.eq.s32.totalorder %s19, 0
      %p138 = por %p136, %p137
      %p139 = scmp.ne.s32.totalorder %s127, %s128
      %p140 = scmp.eq.s32.totalorder %s20, 1
      %p141 = por %p139, %p140
      %p143 = scmp.ne.s32.totalorder %s128, %s142
      %p144 = scmp.eq.s32.totalorder %s20, 0
      %p145 = por %p143, %p144
      %s146 = ssub.s32 %s21, %s33
      %s147 = ssub.s32 %s22, %s29
      %s148 = sor.u32 %s146, %s147
      %p149 = scmp.eq.s32.totalorder %s148, 0
      %s151 = sadd.s32 %s150, 1
      %s152 = scalar_select %p149, %s150, %s151
      %p155 = pneg %p149
      %p156 = scmp.eq.s32.totalorder %s14, 1
      %p157 = por %p155, %p156
      %p158 = scmp.ne.s32.totalorder %s150, %s153
      %p159 = scmp.eq.s32.totalorder %s14, 0
      %p160 = por %p158, %p159
      %p161 = scmp.ne.s32.totalorder %s150, %s153
      %p162 = scmp.eq.s32.totalorder %s19, 1
      %p163 = por %p161, %p162
      %p164 = scmp.ne.s32.totalorder %s153, %s154
      %p165 = scmp.eq.s32.totalorder %s19, 0
      %p166 = por %p164, %p165
      %p167 = scmp.ne.s32.totalorder %s153, %s154
      %p168 = scmp.eq.s32.totalorder %s20, 1
      %p169 = por %p167, %p168
      %p171 = scmp.ne.s32.totalorder %s154, %s170
      %p172 = scmp.eq.s32.totalorder %s20, 0
      %p173 = por %p171, %p172
      %p174 = scmp.le.s32.totalorder 1, %s14
      %p175 = scmp.lt.s32.totalorder %s14, 3
      %p176 = pnand %p174, %p175
      %p177 = pneg %p176
      // Predicated region
      $region9: #{tpu_custom_call.1} parent=5 // pred_check
        _
      $region10: #{tpu_custom_call.1} parent=5 // pred_check_branch
        %179 = sbr.rel (%p176) target = $region12
      $region11: #{tpu_custom_call.1} parent=5 // pred_region
        %s180 = ssub.s32 %s14, 1
        // Predicated region
        $region13: #{tpu_custom_call.1} parent=11 // pred_check
          %p181 = pneg %p75
        $region14: #{tpu_custom_call.1} parent=11 // pred_check_branch
          %183 = sbr.rel (%p181) target = $region16
        $region15: #{tpu_custom_call.1} parent=11 // pred_region
          _
        $region16: #{tpu_custom_call.1} parent=11 // pred_fallthru
          _
        // Predicated region
        $region17: #{tpu_custom_call.1} parent=11 // pred_check
          %p184 = pneg %p96
        $region18: #{tpu_custom_call.1} parent=11 // pred_check_branch
          %186 = sbr.rel (%p184) target = $region20
        $region19: #{tpu_custom_call.1} parent=11 // pred_region
          _
        $region20: #{tpu_custom_call.1} parent=11 // pred_fallthru
          _
        // Predicated region
        $region21: #{tpu_custom_call.1} parent=11 // pred_check
          %p187 = pneg %p117
        $region22: #{tpu_custom_call.1} parent=11 // pred_check_branch
          %189 = sbr.rel (%p187) target = $region24
        $region23: #{tpu_custom_call.1} parent=11 // pred_region
          _
        $region24: #{tpu_custom_call.1} parent=11 // pred_fallthru
          _
        // Predicated region
        $region25: #{tpu_custom_call.1} parent=11 // pred_check
          %p190 = pneg %p138
        $region26: #{tpu_custom_call.1} parent=11 // pred_check_branch
          %192 = sbr.rel (%p190) target = $region28
        $region27: #{tpu_custom_call.1} parent=11 // pred_region
          _
        $region28: #{tpu_custom_call.1} parent=11 // pred_fallthru
          _
      $region12: #{tpu_custom_call.1} parent=5 // pred_fallthru
        _
      %p193 = scmp.lt.s32.totalorder %s14, 2
      // Predicated region
      $region29: #{tpu_custom_call.1} parent=5 // pred_check
        %p194 = pneg %p193
      $region30: #{tpu_custom_call.1} parent=5 // pred_check_branch
        %196 = sbr.rel (%p194) target = $region32
      $region31: #{tpu_custom_call.1} parent=5 // pred_region
        // Predicated region
        $region33: #{tpu_custom_call.1} parent=31 // pred_check
          %p197 = pneg %p48
        $region34: #{tpu_custom_call.1} parent=31 // pred_check_branch
          %199 = sbr.rel (%p197) target = $region36
        $region35: #{tpu_custom_call.1} parent=31 // pred_region
          %s200 = smul.u32 2, %s22
          %p201 = scmp.lt.s32.totalorder %s21, 1
          %s202 = scalar_select %p201, %s21, 1
          %p203 = scmp.lt.s32.totalorder %s200, 1
          %s204 = scalar_select %p203, %s200, 1
          %s205 = smul.addr %s202, 2
          %s206 = sadd.s32 %s204, %s205
          %s207 = smul.addr %s206, 4
          %s208 = scalar_lea.vmem %s0, %s207
          %s209 = smul.u32 2, %s22
        $region36: #{tpu_custom_call.1} parent=31 // pred_fallthru
          _
      $region32: #{tpu_custom_call.1} parent=5 // pred_fallthru
        _
      %p210 = scmp.le.s32.totalorder 1, %s14
      %p211 = scmp.lt.s32.totalorder %s14, 3
      %p212 = pnand %p210, %p211
      %p213 = pneg %p212
      // Predicated region
      $region37: #{tpu_custom_call.1} parent=5 // pred_check
        _
      $region38: #{tpu_custom_call.1} parent=5 // pred_check_branch
        %215 = sbr.rel (%p212) target = $region40
      $region39: #{tpu_custom_call.1} parent=5 // pred_region
        %s216 = ssub.s32 %s14, 1
        %s217 = smul.u32 2, %s24
        %p218 = scmp.lt.s32.totalorder %s23, 1
        %s219 = scalar_select %p218, %s23, 1
        %p220 = scmp.lt.s32.totalorder %s217, 1
        %s221 = scalar_select %p220, %s217, 1
        %s222 = smul.addr %s219, 2
        %s223 = sadd.s32 %s221, %s222
        %s224 = smul.addr %s223, 4
        %s225 = scalar_lea.vmem %s0, %s224
        %p226 = pneg %p54
        %p227 = pneg %p51
        %p228 = pneg %p75
        %p229 = pneg %p72
        %p230 = pneg %p96
        %p231 = pneg %p93
        %p232 = pneg %p117
        %p233 = pneg %p114
        %p234 = pneg %p138
        %p235 = pneg %p135
        %p236 = pneg %p166
        %p237 = pneg %p163
        %s238 = sand.u32 %s153, 1
        %s239 = scalar_lea.sflag [#allocation3], %s238
        %s240 = sand.u32 %s153, 1
        %s241 = smul.addr %s240, 16
        %s242 = scalar_lea.vmem [#allocation2], %s241
        %s243 = smul.u32 2, %s24
        %p244 = scmp.lt.s32.totalorder %s23, 1
        %s245 = scalar_select %p244, %s23, 1
        %p246 = scmp.lt.s32.totalorder %s243, 1
        %s247 = scalar_select %p246, %s243, 1
        %s248 = smul.addr %s245, 2
        %s249 = sadd.s32 %s247, %s248
        %s250 = smul.addr %s249, 4
        %s251 = scalar_lea.vmem %s0, %s250
        %s252 = smul.u32 2, %s24
        %s253 = smul.u32 2, %s24
        %v254 = vld [vmem:[%s251] sm:$0xff]
        %v255 = vld [vmem:[%s1] sm:$0xff]
        %v256 = vld [vmem:[%s2] sm:$0xff]
        %258 = vset.pattern.permute.xlu0 0
        %259 = vperm.xlu0 %258, %v256
        %v260 = vpop.permute.xlu0 %259
        %v263 = vcombine.high %v254, %v254
        %vm264 = vcmask 31744
        %v266 = vsel %vm264, %v255, 0
        %vm268 = vcmask 1043456
        %v269 = vsel %vm268, %v254, 0
        %v271 = vsel %vm268, %v263, 0
        %273 = vmatprep.subr.mxu0 %v271
        %274 = vmatpush1.msra.mxu0 %v269
        %275 = vmatprep.subr.mxu0 0.0
        %276 = vmatpush1.msra.mxu0 0.0
        %277 = vmatprep.subr.mxu0 0.0
        %278 = vmatpush1.msra.mxu0 0.0
        %279 = vmatprep.subr.mxu0 0.0
        %280 = vmatpush1.msra.mxu0 0.0
        %281 = vmatprep.subr.mxu0 0.0
        %282 = vmatpush1.msra.mxu0 0.0
        %283 = vmatprep.subr.mxu0 0.0
        %284 = vmatpush1.msra.mxu0 0.0
        %285 = vmatprep.subr.mxu0 0.0
        %286 = vmatpush1.msra.mxu0 0.0
        %287 = vmatprep.subr.mxu0 0.0
        %288 = vmatpush1.msra.mxu0 0.0
        %289 = vmatprep.subr.mxu0 0.0
        %290 = vmatpush1.msra.mxu0 0.0
        %291 = vmatprep.subr.mxu0 0.0
        %292 = vmatpush1.msra.mxu0 0.0
        %293 = vmatprep.subr.mxu0 0.0
        %294 = vmatpush1.msra.mxu0 0.0
        %295 = vmatprep.subr.mxu0 0.0
        %296 = vmatpush1.msra.mxu0 0.0
        %297 = vmatprep.subr.mxu0 0.0
        %298 = vmatpush1.msra.mxu0 0.0
        %299 = vmatprep.subr.mxu0 0.0
        %300 = vmatpush1.msra.mxu0 0.0
        %301 = vmatprep.subr.mxu0 0.0
        %302 = vmatpush1.msra.mxu0 0.0
        %303 = vmatprep.subr.mxu0 0.0
        %304 = vmatpush1.msra.mxu0 0.0
        %305 = vmatprep.subr.mxu0 0.0
        %306 = vmatpush1.msra.mxu0 0.0
        %307 = vmatprep.subr.mxu0 0.0
        %308 = vmatpush1.msra.mxu0 0.0
        %309 = vmatprep.subr.mxu0 0.0
        %310 = vmatpush1.msra.mxu0 0.0
        %311 = vmatprep.subr.mxu0 0.0
        %312 = vmatpush1.msra.mxu0 0.0
        %313 = vmatprep.subr.mxu0 0.0
        %314 = vmatpush1.msra.mxu0 0.0
        %315 = vmatprep.subr.mxu0 0.0
        %316 = vmatpush1.msra.mxu0 0.0
        %317 = vmatprep.subr.mxu0 0.0
        %318 = vmatpush1.msra.mxu0 0.0
        %319 = vmatprep.subr.mxu0 0.0
        %320 = vmatpush1.msra.mxu0 0.0
        %321 = vmatprep.subr.mxu0 0.0
        %322 = vmatpush1.msra.mxu0 0.0
        %323 = vmatprep.subr.mxu0 0.0
        %324 = vmatpush1.msra.mxu0 0.0
        %325 = vmatprep.subr.mxu0 0.0
        %326 = vmatpush1.msra.mxu0 0.0
        %327 = vmatprep.subr.mxu0 0.0
        %328 = vmatpush1.msra.mxu0 0.0
        %329 = vmatprep.subr.mxu0 0.0
        %330 = vmatpush1.msra.mxu0 0.0
        %331 = vmatprep.subr.mxu0 0.0
        %332 = vmatpush1.msra.mxu0 0.0
        %333 = vmatprep.subr.mxu0 0.0
        %334 = vmatpush1.msra.mxu0 0.0
        %335 = vmatprep.subr.mxu0 0.0
        %336 = vmatpush1.msra.mxu0 0.0
        %337 = vmatprep.mubr.f32.mxu0 0.0
        %338 = vmatmul.mubr.f32.gmra.mrb[0].mxu0 %v266
        %v339 = vpop.f32.mrb[0].mxu0
        %v340 = vadd.f32 %v260, %v339
        %v341 = vpop.f32.mrb[0].mxu0
        %v342 = vadd.f32 %v260, %v341
        %343 = vdwg.mxu0
        %v344 = vrot.slane %v340, 4
        %v345 = vadd.f32 %v340, %v344
        %v346 = vrot.slane %v345, 2
        %v347 = vadd.f32 %v345, %v346
        %v348 = vrot.slane %v347, 1
        %v349 = vadd.f32 %v347, %v348
        %v350 = vrot.slane %v342, 4
        %v351 = vadd.f32 %v342, %v350
        %v352 = vrot.slane %v351, 2
        %v353 = vadd.f32 %v351, %v352
        %v354 = vrot.slane %v353, 1
        %v355 = vadd.f32 %v353, %v354
        %v356 = vrcp.pop 8.0
        %v357 = vmul.f32 %v349, %v356
        %v358 = vmul.f32 %v355, %v356
        %v359 = vsub.f32 %v340, %v357
        %v360 = vsub.f32 %v342, %v358
        %v361 = vmul.f32 %v359, %v359
        %v362 = vmul.f32 %v360, %v360
        %v363 = vrot.slane %v361, 4
        %v364 = vadd.f32 %v361, %v363
        %v365 = vrot.slane %v364, 2
        %v366 = vadd.f32 %v364, %v365
        %v367 = vrot.slane %v366, 1
        %v368 = vadd.f32 %v366, %v367
        %v369 = vrot.slane %v362, 4
        %v370 = vadd.f32 %v362, %v369
        %v371 = vrot.slane %v370, 2
        %v372 = vadd.f32 %v370, %v371
        %v373 = vrot.slane %v372, 1
        %v374 = vadd.f32 %v372, %v373
        %v375 = vmul.f32 %v368, %v356
        %v376 = vmul.f32 %v374, %v356
        %v377 = vadd.f32 %v375, 1e-06
        %v378 = vadd.f32 %v376, 1e-06
        %v379 = vrsqrt.pop %v377
        %v380 = vrsqrt.pop %v378
        %v381 = vmul.f32 %v359, %v379
        %v382 = vmul.f32 %v360, %v380
        %v383 = vld [vmem:[%s3] sm:$0xff]
        %385 = vset.pattern.permute.xlu0 0
        %386 = vperm.xlu0 %385, %v383
        %v387 = vpop.permute.xlu0 %386
        %v389 = vmul.f32 %v381, %v387
        %v390 = vmul.f32 %v382, %v387
        %v391 = vld [vmem:[%s4] sm:$0xff]
        %393 = vset.pattern.permute.xlu0 0
        %394 = vperm.xlu0 %393, %v391
        %v395 = vpop.permute.xlu0 %394
        %v397 = vadd.f32 %v389, %v395
        %v398 = vadd.f32 %v390, %v395
        %399 = vst [vmem:[%s242] sm:$0xff] %v397
        %400 = vst [vmem:[%s242 + $0x8] sm:$0xff] %v398
        %s401 = sand.u32 %s153, 1
        %s402 = scalar_lea.sflag [#allocation3], %s401
        %s403 = sand.u32 %s153, 1
        %s404 = smul.addr %s403, 16
        %s405 = scalar_lea.vmem [#allocation2], %s404
        // Predicated region
        $region41: #{tpu_custom_call.1} parent=39 // pred_check
          %p406 = pneg %p163
        $region42: #{tpu_custom_call.1} parent=39 // pred_check_branch
          %408 = sbr.rel (%p406) target = $region44
        $region43: #{tpu_custom_call.1} parent=39 // pred_region
          %s409 = smul.u32 2, %s24
          %s411 = ssub.s32 256, 256
          %412 = vsyncadd %s402, %s411
          %s413 = smul.addr %s23, 2
          %s414 = sadd.s32 %s409, %s413
          %s415 = smul.addr %s414, 128
          %s416 = scalar_lea.hbm %s5, %s415
          %s418 = sshll.u32 %s405, 4
          %s419 = int_to_ptr.vmem [resolvable:$true] %s418
          %421 = dma.vmem_to_hbm [thread:$0]  %s419, 256, %s416, %s402
        $region44: #{tpu_custom_call.1} parent=39 // pred_fallthru
          _
      $region40: #{tpu_custom_call.1} parent=5 // pred_fallthru
        _
      %p422 = scmp.le.s32.totalorder 2, %s14
      // Predicated region
      $region45: #{tpu_custom_call.1} parent=5 // pred_check
        %p423 = pneg %p422
      $region46: #{tpu_custom_call.1} parent=5 // pred_check_branch
        %425 = sbr.rel (%p423) target = $region48
      $region47: #{tpu_custom_call.1} parent=5 // pred_region
        %s426 = ssub.s32 %s14, 2
        // Predicated region
        $region49: #{tpu_custom_call.1} parent=47 // pred_check
          %p427 = pneg %p169
        $region50: #{tpu_custom_call.1} parent=47 // pred_check_branch
          %429 = sbr.rel (%p427) target = $region52
        $region51: #{tpu_custom_call.1} parent=47 // pred_region
          %s430 = sand.u32 %s154, 1
          %s431 = scalar_lea.sflag [#allocation3], %s430
          %s432 = sand.u32 %s154, 1
          %s433 = smul.addr %s432, 16
          %s434 = scalar_lea.vmem [#allocation2], %s433
          %435 = dma.done %s431, 256
        $region52: #{tpu_custom_call.1} parent=47 // pred_fallthru
          _
      $region48: #{tpu_custom_call.1} parent=5 // pred_fallthru
        _
    $region6: #{tpu_custom_call.1} parent=1 // loop_footer
      %s18 = sadd.s32 1, %s14
    $region7: #{tpu_custom_call.1} parent=1 // loop_footer_branch
      %13 = sbr.rel target = $region3
    $region8: #{tpu_custom_call.1} parent=1 // loop_exit
      _
    %436 = vsyncpa [#allocation3], 1
    %s437 = scalar_lea.sflag [#allocation3], 1
    %438 = vsyncpa %s437, 1

</llo_original>
